<compile_context>
chip_gen: v6e
topology: v6e:2x2x1
jax: 0.10.0
libtpu: 0.0.40
codegen_flags: <defaults>
</compile_context>

<pallas_src>
import jax
import jax.numpy as jnp
from jax.experimental import pallas as pl
from jax.experimental.pallas import tpu as pltpu

# Small stand-in sizes (module hardcodes 224x224; we parameterize and shrink).
IMG_H = IMG_W = 64            # image spatial size
PATCH_H = PATCH_W = 16        # sticker (adversarial patch) size
LOC = (24, 32)                # (x1, y1) sticker location
K = 16                        # synthetic model patch-conv kernel / stride
NUM_CLASSES = 16
C_PAD = 128                   # lane-dense padded class dim
D = 3 * K * K                 # flattened patch dim = 768 (= 6 * 128)
P = (IMG_H // K) * (IMG_W // K)   # number of patches per image
SUBLANE = 8                   # f32 sublane tile


def _extract_patches(x):
    """NCHW -> (N, P, D): non-overlapping KxK patches, D ordered (c, kh, kw)."""
    n, c, h, w = x.shape
    hp, wp = h // K, w // K
    x = x.reshape(n, c, hp, K, wp, K)
    x = x.transpose(0, 2, 4, 1, 3, 5)            # (N, hp, wp, c, K, K)
    return x.reshape(n, hp * wp, c * K * K)


# -----------------------------------------------------------------------------
# Fused kernel: composite (in pooled space) + mean over patches + matmul
# -----------------------------------------------------------------------------
def _fused_forward_kernel(img_ref, stk_ref, w_ref, out_ref):
    # img_ref: (1, P, D)   masked image, patch layout, this batch element
    # stk_ref: (1, NT, D)  sticker patches (only the patches it touches)
    # w_ref:   (D, C_PAD)  weight, lane-dense padded (DMA'd once, VMEM-resident)
    # out_ref: (1, 8, C_PAD)
    img_sum = jnp.sum(img_ref[0], axis=0, keepdims=True)        # (1, D)  XLU
    stk_sum = jnp.sum(stk_ref[0], axis=0, keepdims=True)        # (1, D)
    # sum over all P patches of (masked + sticker), then mean.
    pooled = (img_sum + stk_sum) * (1.0 / float(P))             # (1, D)
    pooled8 = jnp.broadcast_to(pooled, (SUBLANE, D))            # fill sublanes
    out_ref[0] = jnp.dot(pooled8, w_ref[...],
                         preferred_element_type=jnp.float32)    # (8, C_PAD)


def fused_forward(img_patches, stk_patches, w_pad):
    B = img_patches.shape[0]
    nt = stk_patches.shape[1]
    out = pl.pallas_call(
        _fused_forward_kernel,
        out_shape=jax.ShapeDtypeStruct((B, SUBLANE, C_PAD), jnp.float32),
        grid=(B,),
        in_specs=[
            pl.BlockSpec((1, P, D), lambda b: (b, 0, 0)),
            pl.BlockSpec((1, nt, D), lambda b: (0, 0, 0)),   # broadcast
            pl.BlockSpec((D, C_PAD), lambda b: (0, 0)),      # fetched once
        ],
        out_specs=pl.BlockSpec((1, SUBLANE, C_PAD), lambda b: (b, 0, 0)),
        compiler_params=pltpu.CompilerParams(
            dimension_semantics=("parallel",)),
    )(img_patches, stk_patches, w_pad)
    return out[:, 0, :NUM_CLASSES]


# -----------------------------------------------------------------------------
# Wrapper reproducing PatchAttackWrapper semantics
# -----------------------------------------------------------------------------
class PatchAttackWrapper:
    def __init__(self, model_weight, img, size, loc):
        self.batch_size = img.shape[0]
        self.x1, self.y1 = loc
        self.x2, self.y2 = self.x1 + size[0], self.y1 + size[1]

        # mask out the sticker window on the fixed image (same as torch init)
        mask = jnp.ones((1, 3, IMG_H, IMG_W), jnp.float32)
        mask = mask.at[:, :, self.x1:self.x2, self.y1:self.y2].set(0.0)
        masked = (mask * img).astype(jnp.float32)

        # Init-time glue: store the fixed masked image in patch layout so the
        # per-forward kernel never needs an XLA transpose / HBM round trip.
        self.img_patches = _extract_patches(masked)                # (B, P, D)

        # Lane-dense padded weight (D, 128): unmasked stores, full MXU lanes.
        self.w_pad = (jnp.zeros((D, C_PAD), jnp.float32)
                      .at[:, :NUM_CLASSES].set(model_weight.astype(jnp.float32)))

        # Static patch-grid footprint of the sticker window.
        self.pr0, self.pr1 = self.x1 // K, (self.x2 - 1) // K
        self.pc0, self.pc1 = self.y1 // K, (self.y2 - 1) // K
        self.canvas_h = (self.pr1 - self.pr0 + 1) * K
        self.canvas_w = (self.pc1 - self.pc0 + 1) * K
        self.off_r = self.x1 - self.pr0 * K
        self.off_c = self.y1 - self.pc0 * K

    def forward(self, subimg):
        # Tiny glue (~3 KiB of data): sticker contribution in patch space,
        # restricted to the patches it actually touches.  Patch positions are
        # irrelevant for the spatial mean, so only the touched slabs are needed.
        sub = subimg.astype(jnp.float32)
        canvas = jnp.zeros((1, 3, self.canvas_h, self.canvas_w), jnp.float32)
        canvas = canvas.at[:, :,
                           self.off_r:self.off_r + (self.x2 - self.x1),
                           self.off_c:self.off_c + (self.y2 - self.y1)].set(sub)
        stk_patches = _extract_patches(canvas)                     # (1, NT, D)
        return fused_forward(self.img_patches, stk_patches, self.w_pad)


if __name__ == "__main__":
    key = jax.random.PRNGKey(0)
    k_img, k_sub, k_w = jax.random.split(key, 3)

    B = 2
    img = jax.random.uniform(k_img, (B, 3, IMG_H, IMG_W), jnp.float32)
    subimg = jax.random.uniform(k_sub, (1, 3, PATCH_H, PATCH_W), jnp.float32)
    # Deterministic synthetic model weight (patch-conv flattened to a matrix).
    weight = jax.random.normal(k_w, (D, NUM_CLASSES), jnp.float32) * 0.02

    wrapper = PatchAttackWrapper(weight, img, (PATCH_H, PATCH_W), LOC)
    logits = wrapper.forward(subimg)
    jax.block_until_ready(logits)
    assert logits.shape == (B, NUM_CLASSES)
    assert logits.dtype == jnp.float32

    # Pure-JAX reference mirroring the torch forward exactly:
    # attacked = masked + sticker; logits = mean_{Hp,Wp}(model(attacked)).
    mask = (jnp.ones((1, 3, IMG_H, IMG_W), jnp.float32)
            .at[:, :, LOC[0]:LOC[0] + PATCH_H, LOC[1]:LOC[1] + PATCH_W].set(0.0))
    sticker = jnp.zeros((1, 3, IMG_H, IMG_W), jnp.float32)
    sticker = jax.lax.dynamic_update_slice(sticker, subimg, (0, 0, LOC[0], LOC[1]))
    attacked = mask * img + sticker
    ref_patches = _extract_patches(attacked)                       # (B, P, D)
    ref = jnp.mean(jnp.einsum("bpd,dc->bpc", ref_patches, weight), axis=1)
    assert jnp.allclose(logits, ref, atol=1e-3, rtol=1e-3)

    print("KERNEL_OK")
</pallas_src>

<mosaic_0001>
module attributes {stable_mosaic.version = 11 : i64} {
  func.func @_fused_forward_kernel(%arg0: i32, %arg1: memref<1x16x768xf32, #tpu.memory_space<vmem>>, %arg2: memref<1x2x768xf32, #tpu.memory_space<vmem>>, %arg3: memref<768x128xf32, #tpu.memory_space<vmem>>, %arg4: memref<1x8x128xf32, #tpu.memory_space<vmem>>) attributes {dimension_semantics = [#tpu.dimension_semantics<parallel>], iteration_bounds = array<i64: 2>, scalar_prefetch = 0 : i64, scratch_operands = 0 : i64, tpu.core_type = #tpu.core_type<tc>, window_params = [{transform_indices = @transform_0, window_bounds = array<i64: 1, 16, 768>}, {pipeline_mode = #tpu.pipeline_mode<synchronous>, transform_indices = @transform_1, window_bounds = array<i64: 1, 2, 768>}, {pipeline_mode = #tpu.pipeline_mode<synchronous>, transform_indices = @transform_2, window_bounds = array<i64: 768, 128>}, {transform_indices = @transform_3, window_bounds = array<i64: 1, 8, 128>}]} {
    %c0 = arith.constant 0 : index
    %c0_0 = arith.constant 0 : index
    %c0_1 = arith.constant 0 : index
    %0 = vector.load %arg1[%c0, %c0_0, %c0_1] : memref<1x16x768xf32, #tpu.memory_space<vmem>>, vector<1x16x768xf32>
    %1 = vector.shape_cast %0 : vector<1x16x768xf32> to vector<16x768xf32>
    %cst = arith.constant dense<0.000000e+00> : vector<768xf32>
    %2 = vector.multi_reduction <add>, %1, %cst [0] : vector<16x768xf32> to vector<768xf32>
    %3 = vector.shape_cast %2 : vector<768xf32> to vector<1x768xf32>
    %c0_2 = arith.constant 0 : index
    %c0_3 = arith.constant 0 : index
    %c0_4 = arith.constant 0 : index
    %4 = vector.load %arg2[%c0_2, %c0_3, %c0_4] : memref<1x2x768xf32, #tpu.memory_space<vmem>>, vector<1x2x768xf32>
    %5 = vector.shape_cast %4 : vector<1x2x768xf32> to vector<2x768xf32>
    %cst_5 = arith.constant dense<0.000000e+00> : vector<768xf32>
    %6 = vector.multi_reduction <add>, %5, %cst_5 [0] : vector<2x768xf32> to vector<768xf32>
    %7 = vector.shape_cast %6 : vector<768xf32> to vector<1x768xf32>
    %8 = arith.addf %3, %7 : vector<1x768xf32>
    %cst_6 = arith.constant 6.250000e-02 : f32
    %9 = vector.broadcast %cst_6 : f32 to vector<1x768xf32>
    %10 = arith.mulf %8, %9 : vector<1x768xf32>
    %11 = vector.shape_cast %10 : vector<1x768xf32> to vector<1x768xf32>
    %12 = vector.broadcast %11 : vector<1x768xf32> to vector<8x768xf32>
    %c0_7 = arith.constant 0 : index
    %c0_8 = arith.constant 0 : index
    %13 = vector.load %arg3[%c0_7, %c0_8] : memref<768x128xf32, #tpu.memory_space<vmem>>, vector<768x128xf32>
    %cst_9 = arith.constant dense<0.000000e+00> : vector<8x128xf32>
    %14 = tpu.matmul %12, %13, %cst_9 {dimension_numbers = #tpu.dot_dimension_numbers<[1], [0], [0], [1], [0, 0, 1, 1], [], []>} : vector<8x768xf32>, vector<768x128xf32>, vector<8x128xf32> -> vector<8x128xf32>
    %c0_10 = arith.constant 0 : index
    %c0_11 = arith.constant 0 : index
    %c0_12 = arith.constant 0 : index
    %15 = vector.load %arg4[%c0_10, %c0_11, %c0_12] : memref<1x8x128xf32, #tpu.memory_space<vmem>>, vector<1x8x128xf32>
    %16 = vector.shape_cast %15 : vector<1x8x128xf32> to vector<8x128xf32>
    %17 = vector.shape_cast %14 : vector<8x128xf32> to vector<1x8x128xf32>
    tpu.vector_store %arg4[%c0_10, %c0_11, %c0_12], %17 {strides = array<i32>} : memref<1x8x128xf32, #tpu.memory_space<vmem>>, vector<1x8x128xf32>,
    return
  }
  func.func @transform_0(%arg0: i32) -> (i32, i32, i32) {
    %c0_i32 = arith.constant 0 : i32
    %c0_i32_0 = arith.constant 0 : i32
    %c0_i32_1 = arith.constant 0 : i32
    return %arg0, %c0_i32, %c0_i32_0 : i32, i32, i32
  }
  func.func @transform_1(%arg0: i32) -> (i32, i32, i32) {
    %c0_i32 = arith.constant 0 : i32
    %c0_i32_0 = arith.constant 0 : i32
    %c0_i32_1 = arith.constant 0 : i32
    %c0_i32_2 = arith.constant 0 : i32
    return %c0_i32, %c0_i32_0, %c0_i32_1 : i32, i32, i32
  }
  func.func @transform_2(%arg0: i32) -> (i32, i32) {
    %c0_i32 = arith.constant 0 : i32
    %c0_i32_0 = arith.constant 0 : i32
    %c0_i32_1 = arith.constant 0 : i32
    return %c0_i32, %c0_i32_0 : i32, i32
  }
  func.func @transform_3(%arg0: i32) -> (i32, i32, i32) {
    %c0_i32 = arith.constant 0 : i32
    %c0_i32_0 = arith.constant 0 : i32
    %c0_i32_1 = arith.constant 0 : i32
    return %arg0, %c0_i32, %c0_i32_0 : i32, i32, i32
  }
}

</mosaic_0001>

<llo_original>
// kernel: tpu_custom_call.1
$region0: #{tpu_custom_call.1}
  #allocation0 [shape = 'u32[]', space=smem, size = 0x4, offset = 0x4, fixed_abs, tag = 'smem constant byte address 0x4 - core index']
  #allocation1 [shape = 'u32[144,128]{1,0:T(1,128)}', space=vmem, size = 0x12000, scoped, tag = 'internal scratch']
  %s0 = inlined_call_operand.hbm [shape: f32[2,16,768], index: 0, kind: input, shape index: {}]
  %s1 = inlined_call_operand.hbm [shape: f32[1,2,768], index: 1, kind: input, shape index: {}]
  %s2 = inlined_call_operand.hbm [shape: f32[768,128], index: 2, kind: input, shape index: {}]
  %s3 = inlined_call_operand.hbm [shape: f32[2,8,128], index: 3, kind: output, shape index: {}]
  %s4 = sld [smem:[#allocation0]]
  $region57: #{tpu_custom_call.1} parent=0
    _
  %s6 = ssub.s32 1, %s4
  %s7 = scalar_select 0, %s6, %s4
  $region1: #{tpu_custom_call.1} parent=0
    #allocation2 [shape = 'u8[98304]{0}', space=vmem, size = 0x18000, scoped, tag = 'input window, operand 0']
    #allocation3 [shape = 's32[2]{0}', space=sflag, size = 0x8, scoped, tag = 'scoped memory for tpu_custom_call.1']
    #allocation4 [shape = 's32[2]{0}', space=sflag, size = 0x8, scoped, tag = 'scoped memory for tpu_custom_call.1']
    #allocation5 [shape = 'u8[6144]{0}', space=vmem, size = 0x1800, scoped, tag = 'input window, operand 1, single buffered']
    #allocation6 [shape = 's32[1]{0}', space=sflag, size = 0x4, scoped, tag = 'scoped memory for tpu_custom_call.1']
    #allocation7 [shape = 'u8[393216]{0}', space=vmem, size = 0x60000, scoped, tag = 'input window, operand 2, single buffered']
    #allocation8 [shape = 'u8[8192]{0}', space=vmem, size = 0x2000, scoped, tag = 'output window, operand 0']
    %8 = vsyncpa [#allocation3], 0
    %s9 = scalar_lea.sflag [#allocation3], 1
    %10 = vsyncpa %s9, 0
    %11 = vsyncpa [#allocation6], 0
    %12 = vsyncpa [#allocation4], 0
    %s13 = scalar_lea.sflag [#allocation4], 1
    %14 = vsyncpa %s13, 0
    loop: start=0, step=1, limit=4
    $region2: #{tpu_custom_call.1} parent=1 // loop_pre_header
      _
    $region3: #{tpu_custom_call.1} parent=1 // loop_header
      %s16 = sphi 0, %s20
      %p17 = scmp.ge.s32.totalorder %s16, 4
      %s26 = sphi 0, %s28
      %s29 = sphi 0, %s26
      %s30 = sphi 0, %s29
      %s46 = sphi 0, %s30
      %s50 = sphi 0, %s50
      %s52 = sphi 0, %s50
      %s53 = sphi 0, %s52
      %s67 = sphi 0, %s53
      %s71 = sphi 0, %s71
      %s73 = sphi 0, %s71
      %s74 = sphi 0, %s73
      %s88 = sphi 0, %s74
      %s94 = sphi 0, %s96
      %s97 = sphi 0, %s94
      %s98 = sphi 0, %s97
      %s114 = sphi 0, %s98
    $region4: #{tpu_custom_call.1} parent=1 // loop_header_branch
      %19 = sbr.rel (%p17) target = $region8
    $region5: #{tpu_custom_call.1} parent=1 // loop_body
      %s21 = ssub.s32 %s16, 1
      %s22 = ssub.s32 %s16, 2
      %s23 = sadd.s32 %s16, 1
      %s24 = ssub.s32 %s16, %s23
      %p25 = scmp.eq.s32.totalorder %s24, 0
      %s27 = sadd.s32 %s26, 1
      %s28 = scalar_select %p25, %s26, %s27
      %p31 = pneg %p25
      %p32 = scmp.eq.s32.totalorder %s16, 1
      %p33 = por %p31, %p32
      %p34 = scmp.ne.s32.totalorder %s26, %s29
      %p35 = scmp.eq.s32.totalorder %s16, 0
      %p36 = por %p34, %p35
      %p37 = scmp.ne.s32.totalorder %s26, %s29
      %p38 = scmp.eq.s32.totalorder %s21, 1
      %p39 = por %p37, %p38
      %p40 = scmp.ne.s32.totalorder %s29, %s30
      %p41 = scmp.eq.s32.totalorder %s21, 0
      %p42 = por %p40, %p41
      %p43 = scmp.ne.s32.totalorder %s29, %s30
      %p44 = scmp.eq.s32.totalorder %s22, 1
      %p45 = por %p43, %p44
      %p47 = scmp.ne.s32.totalorder %s30, %s46
      %p48 = scmp.eq.s32.totalorder %s22, 0
      %p49 = por %p47, %p48
      %s51 = sadd.s32 %s50, 1
      %p54 = scmp.eq.s32.totalorder %s16, 1
      %p55 = scmp.ne.s32.totalorder %s50, %s52
      %p56 = scmp.eq.s32.totalorder %s16, 0
      %p57 = por %p55, %p56
      %p58 = scmp.ne.s32.totalorder %s50, %s52
      %p59 = scmp.eq.s32.totalorder %s21, 1
      %p60 = por %p58, %p59
      %p61 = scmp.ne.s32.totalorder %s52, %s53
      %p62 = scmp.eq.s32.totalorder %s21, 0
      %p63 = por %p61, %p62
      %p64 = scmp.ne.s32.totalorder %s52, %s53
      %p65 = scmp.eq.s32.totalorder %s22, 1
      %p66 = por %p64, %p65
      %p68 = scmp.ne.s32.totalorder %s53, %s67
      %p69 = scmp.eq.s32.totalorder %s22, 0
      %p70 = por %p68, %p69
      %s72 = sadd.s32 %s71, 1
      %p75 = scmp.eq.s32.totalorder %s16, 1
      %p76 = scmp.ne.s32.totalorder %s71, %s73
      %p77 = scmp.eq.s32.totalorder %s16, 0
      %p78 = por %p76, %p77
      %p79 = scmp.ne.s32.totalorder %s71, %s73
      %p80 = scmp.eq.s32.totalorder %s21, 1
      %p81 = por %p79, %p80
      %p82 = scmp.ne.s32.totalorder %s73, %s74
      %p83 = scmp.eq.s32.totalorder %s21, 0
      %p84 = por %p82, %p83
      %p85 = scmp.ne.s32.totalorder %s73, %s74
      %p86 = scmp.eq.s32.totalorder %s22, 1
      %p87 = por %p85, %p86
      %p89 = scmp.ne.s32.totalorder %s74, %s88
      %p90 = scmp.eq.s32.totalorder %s22, 0
      %p91 = por %p89, %p90
      %s92 = ssub.s32 %s16, %s23
      %p93 = scmp.eq.s32.totalorder %s92, 0
      %s95 = sadd.s32 %s94, 1
      %s96 = scalar_select %p93, %s94, %s95
      %p99 = pneg %p93
      %p100 = scmp.eq.s32.totalorder %s16, 1
      %p101 = por %p99, %p100
      %p102 = scmp.ne.s32.totalorder %s94, %s97
      %p103 = scmp.eq.s32.totalorder %s16, 0
      %p104 = por %p102, %p103
      %p105 = scmp.ne.s32.totalorder %s94, %s97
      %p106 = scmp.eq.s32.totalorder %s21, 1
      %p107 = por %p105, %p106
      %p108 = scmp.ne.s32.totalorder %s97, %s98
      %p109 = scmp.eq.s32.totalorder %s21, 0
      %p110 = por %p108, %p109
      %p111 = scmp.ne.s32.totalorder %s97, %s98
      %p112 = scmp.eq.s32.totalorder %s22, 1
      %p113 = por %p111, %p112
      %p115 = scmp.ne.s32.totalorder %s98, %s114
      %p116 = scmp.eq.s32.totalorder %s22, 0
      %p117 = por %p115, %p116
      %p118 = scmp.le.s32.totalorder 1, %s16
      %p119 = scmp.lt.s32.totalorder %s16, 3
      %p120 = pnand %p118, %p119
      %p121 = pneg %p120
      // Predicated region
      $region9: #{tpu_custom_call.1} parent=5 // pred_check
        _
      $region10: #{tpu_custom_call.1} parent=5 // pred_check_branch
        %123 = sbr.rel (%p120) target = $region12
      $region11: #{tpu_custom_call.1} parent=5 // pred_region
        %s124 = ssub.s32 %s16, 1
        // Predicated region
        $region13: #{tpu_custom_call.1} parent=11 // pred_check
          %p125 = pneg %p63
        $region14: #{tpu_custom_call.1} parent=11 // pred_check_branch
          %127 = sbr.rel (%p125) target = $region16
        $region15: #{tpu_custom_call.1} parent=11 // pred_region
          %s129 = ssub.s32 192, 192
          %130 = vsyncadd [#allocation6], %s129
          %s132 = sshll.u32 [#allocation5], 4
          %s133 = int_to_ptr.vmem [resolvable:$true] %s132
          %135 = dma.hbm_to_vmem [thread:$0]  %s1, 192, %s133, [#allocation6]
        $region16: #{tpu_custom_call.1} parent=11 // pred_fallthru
          _
        // Predicated region
        $region17: #{tpu_custom_call.1} parent=11 // pred_check
          %p136 = pneg %p84
        $region18: #{tpu_custom_call.1} parent=11 // pred_check_branch
          %138 = sbr.rel (%p136) target = $region20
        $region19: #{tpu_custom_call.1} parent=11 // pred_region
          %s140 = ssub.s32 12288, 12288
          %141 = vsyncadd [#allocation6], %s140
          %s142 = sshll.u32 [#allocation7], 4
          %s143 = int_to_ptr.vmem [resolvable:$true] %s142
          %148 = dma.hbm_to_vmem [thread:$0]  %s2, 12288, %s143, [#allocation6], 128, 128, 8
        $region20: #{tpu_custom_call.1} parent=11 // pred_fallthru
          _
      $region12: #{tpu_custom_call.1} parent=5 // pred_fallthru
        _
      %p149 = scmp.lt.s32.totalorder %s16, 2
      // Predicated region
      $region21: #{tpu_custom_call.1} parent=5 // pred_check
        %p150 = pneg %p149
      $region22: #{tpu_custom_call.1} parent=5 // pred_check_branch
        %152 = sbr.rel (%p150) target = $region24
      $region23: #{tpu_custom_call.1} parent=5 // pred_region
        // Predicated region
        $region25: #{tpu_custom_call.1} parent=23 // pred_check
          %p153 = pneg %p36
        $region26: #{tpu_custom_call.1} parent=23 // pred_check_branch
          %155 = sbr.rel (%p153) target = $region28
        $region27: #{tpu_custom_call.1} parent=23 // pred_region
          %s156 = sand.u32 %s26, 1
          %s157 = scalar_lea.sflag [#allocation3], %s156
          %s158 = sand.u32 %s26, 1
          %s159 = smul.addr %s158, 96
          %s160 = scalar_lea.vmem [#allocation2], %s159
          %s162 = ssub.s32 1536, 1536
          %163 = vsyncadd %s157, %s162
          %s164 = smul.addr %s16, 12
          %s165 = smul.addr %s164, 128
          %s166 = scalar_lea.hbm %s0, %s165
          %s167 = sshll.u32 %s160, 4
          %s168 = int_to_ptr.vmem [resolvable:$true] %s167
          %173 = dma.hbm_to_vmem [thread:$0]  %s166, 1536, %s168, %s157, 768, 768, 48
        $region28: #{tpu_custom_call.1} parent=23 // pred_fallthru
          _
      $region24: #{tpu_custom_call.1} parent=5 // pred_fallthru
        _
      %p174 = scmp.le.s32.totalorder 1, %s16
      %p175 = scmp.lt.s32.totalorder %s16, 3
      %p176 = pnand %p174, %p175
      %p177 = pneg %p176
      // Predicated region
      $region29: #{tpu_custom_call.1} parent=5 // pred_check
        _
      $region30: #{tpu_custom_call.1} parent=5 // pred_check_branch
        %179 = sbr.rel (%p176) target = $region32
      $region31: #{tpu_custom_call.1} parent=5 // pred_region
        %s180 = ssub.s32 %s16, 1
        %s181 = sand.u32 %s29, 1
        %s182 = scalar_lea.sflag [#allocation3], %s181
        %s183 = sand.u32 %s29, 1
        %s184 = smul.addr %s183, 96
        %s185 = scalar_lea.vmem [#allocation2], %s184
        // Predicated region
        $region33: #{tpu_custom_call.1} parent=31 // pred_check
          %p186 = pneg %p42
        $region34: #{tpu_custom_call.1} parent=31 // pred_check_branch
          %188 = sbr.rel (%p186) target = $region36
        $region35: #{tpu_custom_call.1} parent=31 // pred_region
          %189 = dma.done %s182, 1536
        $region36: #{tpu_custom_call.1} parent=31 // pred_fallthru
          _
        // Predicated region
        $region37: #{tpu_custom_call.1} parent=31 // pred_check
          %p190 = pneg %p63
        $region38: #{tpu_custom_call.1} parent=31 // pred_check_branch
          %192 = sbr.rel (%p190) target = $region40
        $region39: #{tpu_custom_call.1} parent=31 // pred_region
          %193 = dma.done [#allocation6], 192
        $region40: #{tpu_custom_call.1} parent=31 // pred_fallthru
          _
        // Predicated region
        $region41: #{tpu_custom_call.1} parent=31 // pred_check
          %p194 = pneg %p84
        $region42: #{tpu_custom_call.1} parent=31 // pred_check_branch
          %196 = sbr.rel (%p194) target = $region44
        $region43: #{tpu_custom_call.1} parent=31 // pred_region
          %197 = dma.done [#allocation6], 12288
        $region44: #{tpu_custom_call.1} parent=31 // pred_fallthru
          _
        %s198 = sand.u32 %s29, 1
        %s199 = scalar_lea.sflag [#allocation3], %s198
        %s200 = sand.u32 %s29, 1
        %s201 = smul.addr %s200, 96
        %s202 = scalar_lea.vmem [#allocation2], %s201
        %p203 = pneg %p42
        %p204 = pneg %p39
        %p205 = pneg %p63
        %p206 = pneg %p60
        %p207 = pneg %p84
        %p208 = pneg %p81
        %p209 = pneg %p110
        %p210 = pneg %p107
        %s211 = sand.u32 %s97, 1
        %s212 = scalar_lea.sflag [#allocation4], %s211
        %s213 = sand.u32 %s97, 1
        %s214 = smul.addr %s213, 8
        %s215 = scalar_lea.vmem [#allocation8], %s214
        %v216 = vld [vmem:[%s185] sm:$0xff]
        %v217 = vld [vmem:[%s185 + $0x8] sm:$0xff]
        %v218 = vld [vmem:[%s185 + $0x10] sm:$0xff]
        %v219 = vld [vmem:[%s185 + $0x18] sm:$0xff]
        %v220 = vld [vmem:[%s185 + $0x20] sm:$0xff]
        %v221 = vld [vmem:[%s185 + $0x28] sm:$0xff]
        %v222 = vld [vmem:[%s185 + $0x30] sm:$0xff]
        %v223 = vld [vmem:[%s185 + $0x38] sm:$0xff]
        %v224 = vld [vmem:[%s185 + $0x40] sm:$0xff]
        %v225 = vld [vmem:[%s185 + $0x48] sm:$0xff]
        %v226 = vld [vmem:[%s185 + $0x50] sm:$0xff]
        %v227 = vld [vmem:[%s185 + $0x58] sm:$0xff]
        %v228 = vadd.f32 %v216, %v222
        %v229 = vrot.slane %v228, 4
        %v230 = vadd.f32 %v228, %v229
        %v231 = vrot.slane %v230, 2
        %v232 = vadd.f32 %v230, %v231
        %v233 = vrot.slane %v232, 1
        %v234 = vadd.f32 %v232, %v233
        %v235 = vadd.f32 %v217, %v223
        %v236 = vrot.slane %v235, 4
        %v237 = vadd.f32 %v235, %v236
        %v238 = vrot.slane %v237, 2
        %v239 = vadd.f32 %v237, %v238
        %v240 = vrot.slane %v239, 1
        %v241 = vadd.f32 %v239, %v240
        %v242 = vadd.f32 %v218, %v224
        %v243 = vrot.slane %v242, 4
        %v244 = vadd.f32 %v242, %v243
        %v245 = vrot.slane %v244, 2
        %v246 = vadd.f32 %v244, %v245
        %v247 = vrot.slane %v246, 1
        %v248 = vadd.f32 %v246, %v247
        %v249 = vadd.f32 %v219, %v225
        %v250 = vrot.slane %v249, 4
        %v251 = vadd.f32 %v249, %v250
        %v252 = vrot.slane %v251, 2
        %v253 = vadd.f32 %v251, %v252
        %v254 = vrot.slane %v253, 1
        %v255 = vadd.f32 %v253, %v254
        %v256 = vadd.f32 %v220, %v226
        %v257 = vrot.slane %v256, 4
        %v258 = vadd.f32 %v256, %v257
        %v259 = vrot.slane %v258, 2
        %v260 = vadd.f32 %v258, %v259
        %v261 = vrot.slane %v260, 1
        %v262 = vadd.f32 %v260, %v261
        %v263 = vadd.f32 %v221, %v227
        %v264 = vrot.slane %v263, 4
        %v265 = vadd.f32 %v263, %v264
        %v266 = vrot.slane %v265, 2
        %v267 = vadd.f32 %v265, %v266
        %v268 = vrot.slane %v267, 1
        %v269 = vadd.f32 %v267, %v268
        %v270 = vld [vmem:[#allocation5] sm:$0xff]
        %v271 = vld [vmem:[#allocation5 + $0x8] sm:$0xf]
        %v274 = vcombine.high %v270, %v270
        %v276 = vunpack.c.l.s4 1983009808
        %v277 = vunpack.c.0.s8 %v276
        %v278 = vlaneseq
        %v279 = vshrl.u32 %v278, 7
        %v280 = vsub.s32 %v277, %v279
        %v281 = vrot.slane %v270, %v280
        %v283 = vunpack.c.l.s4 1983009808
        %v284 = vunpack.c.0.s8 %v283
        %v285 = vlaneseq
        %v286 = vshrl.u32 %v285, 7
        %v287 = vsub.s32 %v284, %v286
        %v288 = vrot.slane %v274, %v287
        %v289 = vcombine.high %v281, %v281
        %v290 = vcombine.high %v288, %v288
        %v292 = vunpack.c.l.s4 1983009808
        %v293 = vunpack.c.0.s8 %v292
        %v294 = vlaneseq
        %v295 = vshrl.u32 %v294, 7
        %v296 = vsub.s32 %v293, %v295
        %v297 = vrot.slane %v271, %v296
        %v298 = vcombine.high %v297, %v297
        %vm305 = vcmask 1041408
        %v306 = vsel %vm305, %v281, 0.0
        %v307 = vrot.slane %v306, 4
        %v308 = vadd.f32 %v306, %v307
        %v309 = vrot.slane %v308, 2
        %v310 = vadd.f32 %v308, %v309
        %v311 = vrot.slane %v310, 1
        %v312 = vadd.f32 %v310, %v311
        %v313 = vsel %vm305, %v289, 0.0
        %v314 = vrot.slane %v313, 4
        %v315 = vadd.f32 %v313, %v314
        %v316 = vrot.slane %v315, 2
        %v317 = vadd.f32 %v315, %v316
        %v318 = vrot.slane %v317, 1
        %v319 = vadd.f32 %v317, %v318
        %v320 = vsel %vm305, %v288, 0.0
        %v321 = vrot.slane %v320, 4
        %v322 = vadd.f32 %v320, %v321
        %v323 = vrot.slane %v322, 2
        %v324 = vadd.f32 %v322, %v323
        %v325 = vrot.slane %v324, 1
        %v326 = vadd.f32 %v324, %v325
        %v327 = vsel %vm305, %v290, 0.0
        %v328 = vrot.slane %v327, 4
        %v329 = vadd.f32 %v327, %v328
        %v330 = vrot.slane %v329, 2
        %v331 = vadd.f32 %v329, %v330
        %v332 = vrot.slane %v331, 1
        %v333 = vadd.f32 %v331, %v332
        %v334 = vsel %vm305, %v297, 0.0
        %v335 = vrot.slane %v334, 4
        %v336 = vadd.f32 %v334, %v335
        %v337 = vrot.slane %v336, 2
        %v338 = vadd.f32 %v336, %v337
        %v339 = vrot.slane %v338, 1
        %v340 = vadd.f32 %v338, %v339
        %v341 = vsel %vm305, %v298, 0.0
        %v342 = vrot.slane %v341, 4
        %v343 = vadd.f32 %v341, %v342
        %v344 = vrot.slane %v343, 2
        %v345 = vadd.f32 %v343, %v344
        %v346 = vrot.slane %v345, 1
        %v347 = vadd.f32 %v345, %v346
        %v348 = vadd.f32 %v234, %v312
        %v349 = vadd.f32 %v241, %v319
        %v350 = vadd.f32 %v248, %v326
        %v351 = vadd.f32 %v255, %v333
        %v352 = vadd.f32 %v262, %v340
        %v353 = vadd.f32 %v269, %v347
        %v354 = vmul.f32 %v348, 0.0625
        %v355 = vmul.f32 %v349, 0.0625
        %v356 = vmul.f32 %v350, 0.0625
        %v357 = vmul.f32 %v351, 0.0625
        %v358 = vmul.f32 %v352, 0.0625
        %v359 = vmul.f32 %v353, 0.0625
        %v360 = vld [vmem:[#allocation7] sm:$0xff]
        %v361 = vld [vmem:[#allocation7 + $0x8] sm:$0xff]
        %v362 = vld [vmem:[#allocation7 + $0x10] sm:$0xff]
        %v363 = vld [vmem:[#allocation7 + $0x18] sm:$0xff]
        %v364 = vld [vmem:[#allocation7 + $0x20] sm:$0xff]
        %v365 = vld [vmem:[#allocation7 + $0x28] sm:$0xff]
        %v366 = vld [vmem:[#allocation7 + $0x30] sm:$0xff]
        %v367 = vld [vmem:[#allocation7 + $0x38] sm:$0xff]
        %v368 = vld [vmem:[#allocation7 + $0x40] sm:$0xff]
        %v369 = vld [vmem:[#allocation7 + $0x48] sm:$0xff]
        %v370 = vld [vmem:[#allocation7 + $0x50] sm:$0xff]
        %v371 = vld [vmem:[#allocation7 + $0x58] sm:$0xff]
        %v372 = vld [vmem:[#allocation7 + $0x60] sm:$0xff]
        %v373 = vld [vmem:[#allocation7 + $0x68] sm:$0xff]
        %v374 = vld [vmem:[#allocation7 + $0x70] sm:$0xff]
        %v375 = vld [vmem:[#allocation7 + $0x78] sm:$0xff]
        %v376 = vld [vmem:[#allocation7 + $0x80] sm:$0xff]
        %v377 = vld [vmem:[#allocation7 + $0x88] sm:$0xff]
        %v378 = vld [vmem:[#allocation7 + $0x90] sm:$0xff]
        %v379 = vld [vmem:[#allocation7 + $0x98] sm:$0xff]
        %v380 = vld [vmem:[#allocation7 + $0xa0] sm:$0xff]
        %v381 = vld [vmem:[#allocation7 + $0xa8] sm:$0xff]
        %v382 = vld [vmem:[#allocation7 + $0xb0] sm:$0xff]
        %v383 = vld [vmem:[#allocation7 + $0xb8] sm:$0xff]
        %v384 = vld [vmem:[#allocation7 + $0xc0] sm:$0xff]
        %v385 = vld [vmem:[#allocation7 + $0xc8] sm:$0xff]
        %v386 = vld [vmem:[#allocation7 + $0xd0] sm:$0xff]
        %v387 = vld [vmem:[#allocation7 + $0xd8] sm:$0xff]
        %v388 = vld [vmem:[#allocation7 + $0xe0] sm:$0xff]
        %v389 = vld [vmem:[#allocation7 + $0xe8] sm:$0xff]
        %v390 = vld [vmem:[#allocation7 + $0xf0] sm:$0xff]
        %v391 = vld [vmem:[#allocation7 + $0xf8] sm:$0xff]
        %v392 = vld [vmem:[#allocation7 + $0x100] sm:$0xff]
        %v393 = vld [vmem:[#allocation7 + $0x108] sm:$0xff]
        %v394 = vld [vmem:[#allocation7 + $0x110] sm:$0xff]
        %v395 = vld [vmem:[#allocation7 + $0x118] sm:$0xff]
        %v396 = vld [vmem:[#allocation7 + $0x120] sm:$0xff]
        %v397 = vld [vmem:[#allocation7 + $0x128] sm:$0xff]
        %v398 = vld [vmem:[#allocation7 + $0x130] sm:$0xff]
        %v399 = vld [vmem:[#allocation7 + $0x138] sm:$0xff]
        %v400 = vld [vmem:[#allocation7 + $0x140] sm:$0xff]
        %v401 = vld [vmem:[#allocation7 + $0x148] sm:$0xff]
        %v402 = vld [vmem:[#allocation7 + $0x150] sm:$0xff]
        %v403 = vld [vmem:[#allocation7 + $0x158] sm:$0xff]
        %v404 = vld [vmem:[#allocation7 + $0x160] sm:$0xff]
        %v405 = vld [vmem:[#allocation7 + $0x168] sm:$0xff]
        %v406 = vld [vmem:[#allocation7 + $0x170] sm:$0xff]
        %v407 = vld [vmem:[#allocation7 + $0x178] sm:$0xff]
        %v408 = vld [vmem:[#allocation7 + $0x180] sm:$0xff]
        %v409 = vld [vmem:[#allocation7 + $0x188] sm:$0xff]
        %v410 = vld [vmem:[#allocation7 + $0x190] sm:$0xff]
        %v411 = vld [vmem:[#allocation7 + $0x198] sm:$0xff]
        %v412 = vld [vmem:[#allocation7 + $0x1a0] sm:$0xff]
        %v413 = vld [vmem:[#allocation7 + $0x1a8] sm:$0xff]
        %v414 = vld [vmem:[#allocation7 + $0x1b0] sm:$0xff]
        %v415 = vld [vmem:[#allocation7 + $0x1b8] sm:$0xff]
        %v416 = vld [vmem:[#allocation7 + $0x1c0] sm:$0xff]
        %v417 = vld [vmem:[#allocation7 + $0x1c8] sm:$0xff]
        %v418 = vld [vmem:[#allocation7 + $0x1d0] sm:$0xff]
        %v419 = vld [vmem:[#allocation7 + $0x1d8] sm:$0xff]
        %v420 = vld [vmem:[#allocation7 + $0x1e0] sm:$0xff]
        %v421 = vld [vmem:[#allocation7 + $0x1e8] sm:$0xff]
        %v422 = vld [vmem:[#allocation7 + $0x1f0] sm:$0xff]
        %v423 = vld [vmem:[#allocation7 + $0x1f8] sm:$0xff]
        %v424 = vld [vmem:[#allocation7 + $0x200] sm:$0xff]
        %v425 = vld [vmem:[#allocation7 + $0x208] sm:$0xff]
        %v426 = vld [vmem:[#allocation7 + $0x210] sm:$0xff]
        %v427 = vld [vmem:[#allocation7 + $0x218] sm:$0xff]
        %v428 = vld [vmem:[#allocation7 + $0x220] sm:$0xff]
        %v429 = vld [vmem:[#allocation7 + $0x228] sm:$0xff]
        %v430 = vld [vmem:[#allocation7 + $0x230] sm:$0xff]
        %v431 = vld [vmem:[#allocation7 + $0x238] sm:$0xff]
        %v432 = vld [vmem:[#allocation7 + $0x240] sm:$0xff]
        %v433 = vld [vmem:[#allocation7 + $0x248] sm:$0xff]
        %v434 = vld [vmem:[#allocation7 + $0x250] sm:$0xff]
        %v435 = vld [vmem:[#allocation7 + $0x258] sm:$0xff]
        %v436 = vld [vmem:[#allocation7 + $0x260] sm:$0xff]
        %v437 = vld [vmem:[#allocation7 + $0x268] sm:$0xff]
        %v438 = vld [vmem:[#allocation7 + $0x270] sm:$0xff]
        %v439 = vld [vmem:[#allocation7 + $0x278] sm:$0xff]
        %v440 = vld [vmem:[#allocation7 + $0x280] sm:$0xff]
        %v441 = vld [vmem:[#allocation7 + $0x288] sm:$0xff]
        %v442 = vld [vmem:[#allocation7 + $0x290] sm:$0xff]
        %v443 = vld [vmem:[#allocation7 + $0x298] sm:$0xff]
        %v444 = vld [vmem:[#allocation7 + $0x2a0] sm:$0xff]
        %v445 = vld [vmem:[#allocation7 + $0x2a8] sm:$0xff]
        %v446 = vld [vmem:[#allocation7 + $0x2b0] sm:$0xff]
        %v447 = vld [vmem:[#allocation7 + $0x2b8] sm:$0xff]
        %v448 = vld [vmem:[#allocation7 + $0x2c0] sm:$0xff]
        %v449 = vld [vmem:[#allocation7 + $0x2c8] sm:$0xff]
        %v450 = vld [vmem:[#allocation7 + $0x2d0] sm:$0xff]
        %v451 = vld [vmem:[#allocation7 + $0x2d8] sm:$0xff]
        %v452 = vld [vmem:[#allocation7 + $0x2e0] sm:$0xff]
        %v453 = vld [vmem:[#allocation7 + $0x2e8] sm:$0xff]
        %v454 = vld [vmem:[#allocation7 + $0x2f0] sm:$0xff]
        %v455 = vld [vmem:[#allocation7 + $0x2f8] sm:$0xff]
        %456 = vmatprep.subr.mxu0 0.0
        %457 = vmatpush1.msra.mxu0 %v375
        %458 = vmatprep.subr.mxu0 0.0
        %459 = vmatpush1.msra.mxu0 %v374
        %460 = vmatprep.subr.mxu0 0.0
        %461 = vmatpush1.msra.mxu0 %v373
        %462 = vmatprep.subr.mxu0 0.0
        %463 = vmatpush1.msra.mxu0 %v372
        %464 = vmatprep.subr.mxu0 0.0
        %465 = vmatpush1.msra.mxu0 %v371
        %466 = vmatprep.subr.mxu0 0.0
        %467 = vmatpush1.msra.mxu0 %v370
        %468 = vmatprep.subr.mxu0 0.0
        %469 = vmatpush1.msra.mxu0 %v369
        %470 = vmatprep.subr.mxu0 0.0
        %471 = vmatpush1.msra.mxu0 %v368
        %472 = vmatprep.subr.mxu0 0.0
        %473 = vmatpush1.msra.mxu0 %v367
        %474 = vmatprep.subr.mxu0 0.0
        %475 = vmatpush1.msra.mxu0 %v366
        %476 = vmatprep.subr.mxu0 0.0
        %477 = vmatpush1.msra.mxu0 %v365
        %478 = vmatprep.subr.mxu0 0.0
        %479 = vmatpush1.msra.mxu0 %v364
        %480 = vmatprep.subr.mxu0 0.0
        %481 = vmatpush1.msra.mxu0 %v363
        %482 = vmatprep.subr.mxu0 0.0
        %483 = vmatpush1.msra.mxu0 %v362
        %484 = vmatprep.subr.mxu0 0.0
        %485 = vmatpush1.msra.mxu0 %v361
        %486 = vmatprep.subr.mxu0 0.0
        %487 = vmatpush1.msra.mxu0 %v360
        %488 = vmatprep.subr.mxu0 0.0
        %489 = vmatpush2.msra.mxu0 %v391
        %490 = vmatprep.subr.mxu0 0.0
        %491 = vmatpush2.msra.mxu0 %v390
        %492 = vmatprep.subr.mxu0 0.0
        %493 = vmatpush2.msra.mxu0 %v389
        %494 = vmatprep.subr.mxu0 0.0
        %495 = vmatpush2.msra.mxu0 %v388
        %496 = vmatprep.subr.mxu0 0.0
        %497 = vmatpush2.msra.mxu0 %v387
        %498 = vmatprep.subr.mxu0 0.0
        %499 = vmatpush2.msra.mxu0 %v386
        %500 = vmatprep.subr.mxu0 0.0
        %501 = vmatpush2.msra.mxu0 %v385
        %502 = vmatprep.subr.mxu0 0.0
        %503 = vmatpush2.msra.mxu0 %v384
        %504 = vmatprep.subr.mxu0 0.0
        %505 = vmatpush2.msra.mxu0 %v383
        %506 = vmatprep.subr.mxu0 0.0
        %507 = vmatpush2.msra.mxu0 %v382
        %508 = vmatprep.subr.mxu0 0.0
        %509 = vmatpush2.msra.mxu0 %v381
        %510 = vmatprep.subr.mxu0 0.0
        %511 = vmatpush2.msra.mxu0 %v380
        %512 = vmatprep.subr.mxu0 0.0
        %513 = vmatpush2.msra.mxu0 %v379
        %514 = vmatprep.subr.mxu0 0.0
        %515 = vmatpush2.msra.mxu0 %v378
        %516 = vmatprep.subr.mxu0 0.0
        %517 = vmatpush2.msra.mxu0 %v377
        %518 = vmatprep.subr.mxu0 0.0
        %519 = vmatpush2.msra.mxu0 %v376
        %520 = vmatprep.mubr.f32.mxu0 %v355
        %521 = vmatmul.mubr.f32.gmra.mxu0 %v354
        %v522 = vpop.f32.mrf.mxu0
        %v523 = vadd.f32 0.0, %v522
        %v524 = vpop.f32.mrf.mxu0
        %525 = vdwg.mxu0
        %526 = vmatprep.subr.mxu0 0.0
        %527 = vmatpush1.msra.mxu0 %v407
        %528 = vmatprep.subr.mxu0 0.0
        %529 = vmatpush1.msra.mxu0 %v406
        %530 = vmatprep.subr.mxu0 0.0
        %531 = vmatpush1.msra.mxu0 %v405
        %532 = vmatprep.subr.mxu0 0.0
        %533 = vmatpush1.msra.mxu0 %v404
        %534 = vmatprep.subr.mxu0 0.0
        %535 = vmatpush1.msra.mxu0 %v403
        %536 = vmatprep.subr.mxu0 0.0
        %537 = vmatpush1.msra.mxu0 %v402
        %538 = vmatprep.subr.mxu0 0.0
        %539 = vmatpush1.msra.mxu0 %v401
        %540 = vmatprep.subr.mxu0 0.0
        %541 = vmatpush1.msra.mxu0 %v400
        %542 = vmatprep.subr.mxu0 0.0
        %543 = vmatpush1.msra.mxu0 %v399
        %544 = vmatprep.subr.mxu0 0.0
        %545 = vmatpush1.msra.mxu0 %v398
        %546 = vmatprep.subr.mxu0 0.0
        %547 = vmatpush1.msra.mxu0 %v397
        %548 = vmatprep.subr.mxu0 0.0
        %549 = vmatpush1.msra.mxu0 %v396
        %550 = vmatprep.subr.mxu0 0.0
        %551 = vmatpush1.msra.mxu0 %v395
        %552 = vmatprep.subr.mxu0 0.0
        %553 = vmatpush1.msra.mxu0 %v394
        %554 = vmatprep.subr.mxu0 0.0
        %555 = vmatpush1.msra.mxu0 %v393
        %556 = vmatprep.subr.mxu0 0.0
        %557 = vmatpush1.msra.mxu0 %v392
        %558 = vmatprep.subr.mxu0 0.0
        %559 = vmatpush2.msra.mxu0 %v423
        %560 = vmatprep.subr.mxu0 0.0
        %561 = vmatpush2.msra.mxu0 %v422
        %562 = vmatprep.subr.mxu0 0.0
        %563 = vmatpush2.msra.mxu0 %v421
        %564 = vmatprep.subr.mxu0 0.0
        %565 = vmatpush2.msra.mxu0 %v420
        %566 = vmatprep.subr.mxu0 0.0
        %567 = vmatpush2.msra.mxu0 %v419
        %568 = vmatprep.subr.mxu0 0.0
        %569 = vmatpush2.msra.mxu0 %v418
        %570 = vmatprep.subr.mxu0 0.0
        %571 = vmatpush2.msra.mxu0 %v417
        %572 = vmatprep.subr.mxu0 0.0
        %573 = vmatpush2.msra.mxu0 %v416
        %574 = vmatprep.subr.mxu0 0.0
        %575 = vmatpush2.msra.mxu0 %v415
        %576 = vmatprep.subr.mxu0 0.0
        %577 = vmatpush2.msra.mxu0 %v414
        %578 = vmatprep.subr.mxu0 0.0
        %579 = vmatpush2.msra.mxu0 %v413
        %580 = vmatprep.subr.mxu0 0.0
        %581 = vmatpush2.msra.mxu0 %v412
        %582 = vmatprep.subr.mxu0 0.0
        %583 = vmatpush2.msra.mxu0 %v411
        %584 = vmatprep.subr.mxu0 0.0
        %585 = vmatpush2.msra.mxu0 %v410
        %586 = vmatprep.subr.mxu0 0.0
        %587 = vmatpush2.msra.mxu0 %v409
        %588 = vmatprep.subr.mxu0 0.0
        %589 = vmatpush2.msra.mxu0 %v408
        %590 = vmatprep.mubr.f32.mxu0 %v357
        %591 = vmatmul.mubr.f32.gmra.mxu0 %v356
        %v592 = vpop.f32.mrf.mxu0
        %v593 = vadd.f32 %v523, %v592
        %v594 = vpop.f32.mrf.mxu0
        %595 = vdwg.mxu0
        %596 = vmatprep.subr.mxu0 0.0
        %597 = vmatpush1.msra.mxu0 %v439
        %598 = vmatprep.subr.mxu0 0.0
        %599 = vmatpush1.msra.mxu0 %v438
        %600 = vmatprep.subr.mxu0 0.0
        %601 = vmatpush1.msra.mxu0 %v437
        %602 = vmatprep.subr.mxu0 0.0
        %603 = vmatpush1.msra.mxu0 %v436
        %604 = vmatprep.subr.mxu0 0.0
        %605 = vmatpush1.msra.mxu0 %v435
        %606 = vmatprep.subr.mxu0 0.0
        %607 = vmatpush1.msra.mxu0 %v434
        %608 = vmatprep.subr.mxu0 0.0
        %609 = vmatpush1.msra.mxu0 %v433
        %610 = vmatprep.subr.mxu0 0.0
        %611 = vmatpush1.msra.mxu0 %v432
        %612 = vmatprep.subr.mxu0 0.0
        %613 = vmatpush1.msra.mxu0 %v431
        %614 = vmatprep.subr.mxu0 0.0
        %615 = vmatpush1.msra.mxu0 %v430
        %616 = vmatprep.subr.mxu0 0.0
        %617 = vmatpush1.msra.mxu0 %v429
        %618 = vmatprep.subr.mxu0 0.0
        %619 = vmatpush1.msra.mxu0 %v428
        %620 = vmatprep.subr.mxu0 0.0
        %621 = vmatpush1.msra.mxu0 %v427
        %622 = vmatprep.subr.mxu0 0.0
        %623 = vmatpush1.msra.mxu0 %v426
        %624 = vmatprep.subr.mxu0 0.0
        %625 = vmatpush1.msra.mxu0 %v425
        %626 = vmatprep.subr.mxu0 0.0
        %627 = vmatpush1.msra.mxu0 %v424
        %628 = vmatprep.subr.mxu0 0.0
        %629 = vmatpush2.msra.mxu0 %v455
        %630 = vmatprep.subr.mxu0 0.0
        %631 = vmatpush2.msra.mxu0 %v454
        %632 = vmatprep.subr.mxu0 0.0
        %633 = vmatpush2.msra.mxu0 %v453
        %634 = vmatprep.subr.mxu0 0.0
        %635 = vmatpush2.msra.mxu0 %v452
        %636 = vmatprep.subr.mxu0 0.0
        %637 = vmatpush2.msra.mxu0 %v451
        %638 = vmatprep.subr.mxu0 0.0
        %639 = vmatpush2.msra.mxu0 %v450
        %640 = vmatprep.subr.mxu0 0.0
        %641 = vmatpush2.msra.mxu0 %v449
        %642 = vmatprep.subr.mxu0 0.0
        %643 = vmatpush2.msra.mxu0 %v448
        %644 = vmatprep.subr.mxu0 0.0
        %645 = vmatpush2.msra.mxu0 %v447
        %646 = vmatprep.subr.mxu0 0.0
        %647 = vmatpush2.msra.mxu0 %v446
        %648 = vmatprep.subr.mxu0 0.0
        %649 = vmatpush2.msra.mxu0 %v445
        %650 = vmatprep.subr.mxu0 0.0
        %651 = vmatpush2.msra.mxu0 %v444
        %652 = vmatprep.subr.mxu0 0.0
        %653 = vmatpush2.msra.mxu0 %v443
        %654 = vmatprep.subr.mxu0 0.0
        %655 = vmatpush2.msra.mxu0 %v442
        %656 = vmatprep.subr.mxu0 0.0
        %657 = vmatpush2.msra.mxu0 %v441
        %658 = vmatprep.subr.mxu0 0.0
        %659 = vmatpush2.msra.mxu0 %v440
        %660 = vmatprep.mubr.f32.mxu0 %v359
        %661 = vmatmul.mubr.f32.gmra.mxu0 %v358
        %v662 = vpop.f32.mrf.mxu0
        %v663 = vadd.f32 %v593, %v662
        %v664 = vpop.f32.mrf.mxu0
        %665 = vdwg.mxu0
        %666 = vst [vmem:[%s215] sm:$0xff] %v663
        %s667 = sand.u32 %s97, 1
        %s668 = scalar_lea.sflag [#allocation4], %s667
        %s669 = sand.u32 %s97, 1
        %s670 = smul.addr %s669, 8
        %s671 = scalar_lea.vmem [#allocation8], %s670
        // Predicated region
        $region45: #{tpu_custom_call.1} parent=31 // pred_check
          %p672 = pneg %p107
        $region46: #{tpu_custom_call.1} parent=31 // pred_check_branch
          %674 = sbr.rel (%p672) target = $region48
        $region47: #{tpu_custom_call.1} parent=31 // pred_region
          %s676 = ssub.s32 128, 128
          %677 = vsyncadd %s668, %s676
          %s678 = smul.addr %s21, 128
          %s679 = scalar_lea.hbm %s3, %s678
          %s681 = sshll.u32 %s671, 4
          %s682 = int_to_ptr.vmem [resolvable:$true] %s681
          %684 = dma.vmem_to_hbm [thread:$0]  %s682, 128, %s679, %s668
        $region48: #{tpu_custom_call.1} parent=31 // pred_fallthru
          _
      $region32: #{tpu_custom_call.1} parent=5 // pred_fallthru
        _
      %p685 = scmp.le.s32.totalorder 2, %s16
      // Predicated region
      $region49: #{tpu_custom_call.1} parent=5 // pred_check
        %p686 = pneg %p685
      $region50: #{tpu_custom_call.1} parent=5 // pred_check_branch
        %688 = sbr.rel (%p686) target = $region52
      $region51: #{tpu_custom_call.1} parent=5 // pred_region
        %s689 = ssub.s32 %s16, 2
        // Predicated region
        $region53: #{tpu_custom_call.1} parent=51 // pred_check
          %p690 = pneg %p113
        $region54: #{tpu_custom_call.1} parent=51 // pred_check_branch
          %692 = sbr.rel (%p690) target = $region56
        $region55: #{tpu_custom_call.1} parent=51 // pred_region
          %s693 = sand.u32 %s98, 1
          %s694 = scalar_lea.sflag [#allocation4], %s693
          %s695 = sand.u32 %s98, 1
          %s696 = smul.addr %s695, 8
          %s697 = scalar_lea.vmem [#allocation8], %s696
          %698 = dma.done %s694, 128
        $region56: #{tpu_custom_call.1} parent=51 // pred_fallthru
          _
      $region52: #{tpu_custom_call.1} parent=5 // pred_fallthru
        _
    $region6: #{tpu_custom_call.1} parent=1 // loop_footer
      %s20 = sadd.s32 1, %s16
    $region7: #{tpu_custom_call.1} parent=1 // loop_footer_branch
      %15 = sbr.rel target = $region3
    $region8: #{tpu_custom_call.1} parent=1 // loop_exit
      _
    %699 = vsyncpa [#allocation3], 1
    %s700 = scalar_lea.sflag [#allocation3], 1
    %701 = vsyncpa %s700, 1
    %702 = vsyncpa [#allocation6], 1
    %703 = vsyncpa [#allocation4], 1
    %s704 = scalar_lea.sflag [#allocation4], 1
    %705 = vsyncpa %s704, 1

</llo_original>
